<compile_context>
chip_gen: v7x
topology: tpu7x:2x2x1
jax: 0.10.0
libtpu: 0.0.40
codegen_flags: <defaults>
</compile_context>

<pallas_src>
import jax
import jax.numpy as jnp
from jax.experimental import pallas as pl
from jax.experimental.pallas import tpu as pltpu


def _round_up(x: int, m: int) -> int:
    return ((x + m - 1) // m) * m


def _mlp_readout_kernel(x_ref, bits_ref, w1_ref, b1_ref, w2_ref, b2_ref, o_ref):
    # ---- linear1: bf16 operands on the MXU, f32 accumulation ----
    h = jnp.dot(x_ref[...], w1_ref[...], preferred_element_type=jnp.float32)
    h = h + b1_ref[...]                     # (1, H_pad) broadcasts over rows (f32)
    # ---- relu (f32, VPU) ----
    h = jnp.maximum(h, 0.0)
    # ---- dropout p=0.5: sign bit of precomputed int32 random bits => P(keep)=0.5.
    #      The 1/(1-p)=2.0 scale is folded into w2 host-side.
    h = jnp.where(bits_ref[...] >= 0, h, 0.0)
    # ---- linear2: cast kept activations to bf16 for the MXU, f32 accumulation ----
    y = jnp.dot(h.astype(w2_ref.dtype), w2_ref[...], preferred_element_type=jnp.float32)
    y = y + b2_ref[...]
    o_ref[...] = y.astype(o_ref.dtype)


def mlp_readout(x, w1, b1, w2, b2, *, dropout_key, tile_b=512):
    """x: (B, D_in) f32.  w1: (D_in, H), b1: (H,), w2: (H, D_out), b2: (D_out,).

    Weights are pre-transposed vs. torch (y = x @ W + b == torch's x @ W.T + b).
    Dropout uses p=0.5 training semantics (as in the reference module's forward).
    """
    B, D_in = x.shape
    H = w1.shape[1]
    D_out = w2.shape[1]

    # Lane-dense padding of the hidden / output feature dims (multiples of 128).
    H_pad = _round_up(H, 128)
    O_pad = _round_up(D_out, 128)

    # Batch tiling: TB rows per grid step (sublane-aligned); pad B so blocks are full.
    TB = min(int(tile_b), _round_up(B, 8))
    B_pad = _round_up(B, TB)

    f32, bf16 = jnp.float32, jnp.bfloat16

    # Pad + cast operands (zero padding keeps results exact; padded rows are sliced off).
    x_p = jnp.zeros((B_pad, D_in), dtype=bf16).at[:B, :].set(x.astype(bf16))
    w1_p = jnp.zeros((D_in, H_pad), dtype=bf16).at[:, :H].set(w1.astype(bf16))
    b1_p = jnp.zeros((1, H_pad), dtype=f32).at[0, :H].set(b1.astype(f32))
    # Fold the inverted-dropout scale 1/(1-p) = 2.0 into w2.
    w2_p = jnp.zeros((H_pad, O_pad), dtype=bf16).at[:H, :D_out].set((w2 * 2.0).astype(bf16))
    b2_p = jnp.zeros((1, O_pad), dtype=f32).at[0, :D_out].set(b2.astype(f32))

    # Dropout random bits, generated host-side (TPU hardware PRNG primitives don't
    # lower under interpret mode). Different tiles see independent bits for free.
    bits = jax.lax.bitcast_convert_type(
        jax.random.bits(dropout_key, (B_pad, H_pad), dtype=jnp.uint32), jnp.int32)

    grid = (B_pad // TB,)

    grid_spec = pltpu.PrefetchScalarGridSpec(
        num_scalar_prefetch=0,
        grid=grid,
        in_specs=[
            pl.BlockSpec((TB, D_in), lambda i: (i, 0)),      # x: streamed per batch tile
            pl.BlockSpec((TB, H_pad), lambda i: (i, 0)),     # dropout bits: per batch tile
            pl.BlockSpec((D_in, H_pad), lambda i: (0, 0)),   # w1: VMEM-resident
            pl.BlockSpec((1, H_pad), lambda i: (0, 0)),      # b1: VMEM-resident
            pl.BlockSpec((H_pad, O_pad), lambda i: (0, 0)),  # w2 (x2 scaled): VMEM-resident
            pl.BlockSpec((1, O_pad), lambda i: (0, 0)),      # b2: VMEM-resident
        ],
        out_specs=pl.BlockSpec((TB, O_pad), lambda i: (i, 0)),
    )

    flops = 2 * B_pad * (D_in * H_pad + H_pad * O_pad)
    bytes_accessed = (
        x_p.size * 2 + bits.size * 4 + w1_p.size * 2 + b1_p.size * 4
        + w2_p.size * 2 + b2_p.size * 4 + B_pad * O_pad * 4
    )

    out_padded = pl.pallas_call(
        _mlp_readout_kernel,
        out_shape=jax.ShapeDtypeStruct((B_pad, O_pad), jnp.float32),
        grid_spec=grid_spec,
        compiler_params=pltpu.CompilerParams(
            # Batch tiles are independent -> shard across both TensorCores on v7x.
            dimension_semantics=("parallel",),
            # Raise the default 16/32 MiB scoped cap; 64 MiB is <= physical VMEM on
            # all of v5e/v6e/v7x and our double-buffered tiles are far below it.
            vmem_limit_bytes=64 * 1024 * 1024,
        ),
        cost_estimate=pl.CostEstimate(
            flops=flops, transcendentals=0, bytes_accessed=bytes_accessed),
    )(x_p, bits, w1_p, b1_p, w2_p, b2_p)

    return out_padded[:B, :D_out].astype(x.dtype)


if __name__ == "__main__":
    # Small shapes consistent with the module: input_dim=32 -> hidden=16 -> output_dim=8
    B, D_in, D_out = 8, 32, 8
    H = D_in // 2

    key = jax.random.PRNGKey(0)
    kx, kw1, kb1, kw2, kb2, kdrop = jax.random.split(key, 6)

    x = jax.random.normal(kx, (B, D_in), dtype=jnp.float32)

    # Deterministic parameter init (torch.nn.Linear-style uniform bounds).
    bound1 = 1.0 / (D_in ** 0.5)
    w1 = jax.random.uniform(kw1, (D_in, H), minval=-bound1, maxval=bound1, dtype=jnp.float32)
    b1 = jax.random.uniform(kb1, (H,), minval=-bound1, maxval=bound1, dtype=jnp.float32)
    bound2 = 1.0 / (H ** 0.5)
    w2 = jax.random.uniform(kw2, (H, D_out), minval=-bound2, maxval=bound2, dtype=jnp.float32)
    b2 = jax.random.uniform(kb2, (D_out,), minval=-bound2, maxval=bound2, dtype=jnp.float32)

    out = mlp_readout(x, w1, b1, w2, b2, dropout_key=kdrop)
    jax.block_until_ready(out)
    assert out.shape == (B, D_out) and out.dtype == jnp.float32
    assert bool(jnp.all(jnp.isfinite(out)))
    print("KERNEL_OK")
</pallas_src>

<mosaic_0001>
module attributes {stable_mosaic.version = 11 : i64} {
  func.func @_mlp_readout_kernel(%arg0: i32, %arg1: memref<8x32xbf16, #tpu.memory_space<vmem>>, %arg2: memref<8x128xi32, #tpu.memory_space<vmem>>, %arg3: memref<32x128xbf16, #tpu.memory_space<vmem>>, %arg4: memref<1x128xf32, #tpu.memory_space<vmem>>, %arg5: memref<128x128xbf16, #tpu.memory_space<vmem>>, %arg6: memref<1x128xf32, #tpu.memory_space<vmem>>, %arg7: memref<8x128xf32, #tpu.memory_space<vmem>>) attributes {dimension_semantics = [#tpu.dimension_semantics<parallel>], iteration_bounds = array<i64: 1>, scalar_prefetch = 0 : i64, scratch_operands = 0 : i64, tpu.core_type = #tpu.core_type<tc>, window_params = [{transform_indices = @transform_0, window_bounds = array<i64: 8, 32>}, {transform_indices = @transform_1, window_bounds = array<i64: 8, 128>}, {pipeline_mode = #tpu.pipeline_mode<synchronous>, transform_indices = @transform_2, window_bounds = array<i64: 32, 128>}, {pipeline_mode = #tpu.pipeline_mode<synchronous>, transform_indices = @transform_3, window_bounds = array<i64: 1, 128>}, {pipeline_mode = #tpu.pipeline_mode<synchronous>, transform_indices = @transform_4, window_bounds = array<i64: 128, 128>}, {pipeline_mode = #tpu.pipeline_mode<synchronous>, transform_indices = @transform_5, window_bounds = array<i64: 1, 128>}, {transform_indices = @transform_6, window_bounds = array<i64: 8, 128>}]} {
    %c0 = arith.constant 0 : index
    %c0_0 = arith.constant 0 : index
    %0 = vector.load %arg1[%c0, %c0_0] : memref<8x32xbf16, #tpu.memory_space<vmem>>, vector<8x32xbf16>
    %c0_1 = arith.constant 0 : index
    %c0_2 = arith.constant 0 : index
    %1 = vector.load %arg3[%c0_1, %c0_2] : memref<32x128xbf16, #tpu.memory_space<vmem>>, vector<32x128xbf16>
    %cst = arith.constant dense<0.000000e+00> : vector<8x128xf32>
    %2 = tpu.matmul %0, %1, %cst {dimension_numbers = #tpu.dot_dimension_numbers<[1], [0], [0], [1], [0, 0, 1, 1], [], []>} : vector<8x32xbf16>, vector<32x128xbf16>, vector<8x128xf32> -> vector<8x128xf32>
    %c0_3 = arith.constant 0 : index
    %c0_4 = arith.constant 0 : index
    %3 = vector.load %arg4[%c0_3, %c0_4] : memref<1x128xf32, #tpu.memory_space<vmem>>, vector<1x128xf32>
    %4 = vector.broadcast %3 : vector<1x128xf32> to vector<8x128xf32>
    %5 = arith.addf %2, %4 : vector<8x128xf32>
    %cst_5 = arith.constant 0.000000e+00 : f32
    %6 = vector.broadcast %cst_5 : f32 to vector<8x128xf32>
    %7 = arith.maximumf %5, %6 : vector<8x128xf32>
    %c0_6 = arith.constant 0 : index
    %c0_7 = arith.constant 0 : index
    %8 = vector.load %arg2[%c0_6, %c0_7] : memref<8x128xi32, #tpu.memory_space<vmem>>, vector<8x128xi32>
    %c0_i32 = arith.constant 0 : i32
    %9 = vector.broadcast %c0_i32 : i32 to vector<8x128xi32>
    %10 = arith.cmpi sge, %8, %9 : vector<8x128xi32>
    %cst_8 = arith.constant 0.000000e+00 : f32
    %11 = vector.broadcast %cst_8 : f32 to vector<8x128xf32>
    %12 = arith.select %10, %7, %11 : vector<8x128xi1>, vector<8x128xf32>
    %13 = arith.truncf %12 : vector<8x128xf32> to vector<8x128xbf16>
    %c0_9 = arith.constant 0 : index
    %c0_10 = arith.constant 0 : index
    %14 = vector.load %arg5[%c0_9, %c0_10] : memref<128x128xbf16, #tpu.memory_space<vmem>>, vector<128x128xbf16>
    %cst_11 = arith.constant dense<0.000000e+00> : vector<8x128xf32>
    %15 = tpu.matmul %13, %14, %cst_11 {dimension_numbers = #tpu.dot_dimension_numbers<[1], [0], [0], [1], [0, 0, 1, 1], [], []>} : vector<8x128xbf16>, vector<128x128xbf16>, vector<8x128xf32> -> vector<8x128xf32>
    %c0_12 = arith.constant 0 : index
    %c0_13 = arith.constant 0 : index
    %16 = vector.load %arg6[%c0_12, %c0_13] : memref<1x128xf32, #tpu.memory_space<vmem>>, vector<1x128xf32>
    %17 = vector.broadcast %16 : vector<1x128xf32> to vector<8x128xf32>
    %18 = arith.addf %15, %17 : vector<8x128xf32>
    %c0_14 = arith.constant 0 : index
    %c0_15 = arith.constant 0 : index
    %19 = vector.load %arg7[%c0_14, %c0_15] : memref<8x128xf32, #tpu.memory_space<vmem>>, vector<8x128xf32>
    tpu.vector_store %arg7[%c0_14, %c0_15], %18 {strides = array<i32>} : memref<8x128xf32, #tpu.memory_space<vmem>>, vector<8x128xf32>,
    return
  }
  func.func @transform_0(%arg0: i32) -> (i32, i32) {
    %c0_i32 = arith.constant 0 : i32
    %c0_i32_0 = arith.constant 0 : i32
    return %arg0, %c0_i32 : i32, i32
  }
  func.func @transform_1(%arg0: i32) -> (i32, i32) {
    %c0_i32 = arith.constant 0 : i32
    %c0_i32_0 = arith.constant 0 : i32
    return %arg0, %c0_i32 : i32, i32
  }
  func.func @transform_2(%arg0: i32) -> (i32, i32) {
    %c0_i32 = arith.constant 0 : i32
    %c0_i32_0 = arith.constant 0 : i32
    %c0_i32_1 = arith.constant 0 : i32
    return %c0_i32, %c0_i32_0 : i32, i32
  }
  func.func @transform_3(%arg0: i32) -> (i32, i32) {
    %c0_i32 = arith.constant 0 : i32
    %c0_i32_0 = arith.constant 0 : i32
    %c0_i32_1 = arith.constant 0 : i32
    return %c0_i32, %c0_i32_0 : i32, i32
  }
  func.func @transform_4(%arg0: i32) -> (i32, i32) {
    %c0_i32 = arith.constant 0 : i32
    %c0_i32_0 = arith.constant 0 : i32
    %c0_i32_1 = arith.constant 0 : i32
    return %c0_i32, %c0_i32_0 : i32, i32
  }
  func.func @transform_5(%arg0: i32) -> (i32, i32) {
    %c0_i32 = arith.constant 0 : i32
    %c0_i32_0 = arith.constant 0 : i32
    %c0_i32_1 = arith.constant 0 : i32
    return %c0_i32, %c0_i32_0 : i32, i32
  }
  func.func @transform_6(%arg0: i32) -> (i32, i32) {
    %c0_i32 = arith.constant 0 : i32
    %c0_i32_0 = arith.constant 0 : i32
    return %arg0, %c0_i32 : i32, i32
  }
}

</mosaic_0001>

<llo_original>
// kernel: tpu_custom_call.1
$region0: #{tpu_custom_call.1}
  #allocation0 [shape = 'u32[]', space=smem, size = 0x4, offset = 0x4, fixed_abs, tag = 'smem constant byte address 0x4 - core index']
  #allocation1 [shape = 'u32[144,128]{1,0:T(1,128)}', space=vmem, size = 0x12000, scoped, tag = 'internal scratch']
  %s0 = inlined_call_operand.hbm [shape: bf16[8,32], index: 0, kind: input, shape index: {}]
  %s1 = inlined_call_operand.hbm [shape: s32[8,128], index: 1, kind: input, shape index: {}]
  %s2 = inlined_call_operand.hbm [shape: bf16[32,128], index: 2, kind: input, shape index: {}]
  %s3 = inlined_call_operand.hbm [shape: f32[1,128], index: 3, kind: input, shape index: {}]
  %s4 = inlined_call_operand.hbm [shape: bf16[128,128], index: 4, kind: input, shape index: {}]
  %s5 = inlined_call_operand.hbm [shape: f32[1,128], index: 5, kind: input, shape index: {}]
  %s6 = inlined_call_operand.hbm [shape: f32[8,128], index: 6, kind: output, shape index: {}]
  %s7 = sld [smem:[#allocation0]]
  $region58: #{tpu_custom_call.1} parent=0
    _
  %s9 = ssub.s32 1, %s7
  %s10 = scalar_select 0, %s9, %s7
  $region1: #{tpu_custom_call.1} parent=0
    #allocation2 [shape = 'u8[2048]{0}', space=vmem, size = 0x800, scoped, tag = 'input window, operand 0, single buffered']
    #allocation3 [shape = 's32[1]{0}', space=sflag, size = 0x4, scoped, tag = 'scoped memory for tpu_custom_call.1']
    #allocation4 [shape = 's32[1]{0}', space=sflag, size = 0x4, scoped, tag = 'scoped memory for tpu_custom_call.1']
    #allocation5 [shape = 'u8[4096]{0}', space=vmem, size = 0x1000, scoped, tag = 'input window, operand 1, single buffered']
    #allocation6 [shape = 's32[1]{0}', space=sflag, size = 0x4, scoped, tag = 'scoped memory for tpu_custom_call.1']
    #allocation7 [shape = 'u8[8192]{0}', space=vmem, size = 0x2000, scoped, tag = 'input window, operand 2, single buffered']
    #allocation8 [shape = 'u8[512]{0}', space=vmem, size = 0x400, scoped, tag = 'input window, operand 3, single buffered']
    #allocation9 [shape = 's32[1]{0}', space=sflag, size = 0x4, scoped, tag = 'scoped memory for tpu_custom_call.1']
    #allocation10 [shape = 'u8[32768]{0}', space=vmem, size = 0x8000, scoped, tag = 'input window, operand 4, single buffered']
    #allocation11 [shape = 'u8[512]{0}', space=vmem, size = 0x400, scoped, tag = 'input window, operand 5, single buffered']
    #allocation12 [shape = 's32[1]{0}', space=sflag, size = 0x4, scoped, tag = 'scoped memory for tpu_custom_call.1']
    #allocation13 [shape = 'u8[4096]{0}', space=vmem, size = 0x1000, scoped, tag = 'output window, operand 0, single buffered']
    %11 = vsyncpa [#allocation3], 0
    %12 = vsyncpa [#allocation6], 0
    %13 = vsyncpa [#allocation9], 0
    %14 = vsyncpa [#allocation12], 0
    %15 = vsyncpa [#allocation4], 0
    // Predicated region
    $region2: #{tpu_custom_call.1} parent=1 // pred_check
      _
    $region3: #{tpu_custom_call.1} parent=1 // pred_check_branch
      %17 = sbr.rel (0) target = $region5
    $region4: #{tpu_custom_call.1} parent=1 // pred_region
      %s19 = ssub.s32 64, 64
      %20 = vsyncadd [#allocation3], %s19
      %s22 = sshll.u32 [#allocation2], 4
      %s23 = int_to_ptr.vmem [resolvable:$true] %s22
      %25 = dma.hbm_to_vmem [thread:$0]  %s0, 64, %s23, [#allocation3]
    $region5: #{tpu_custom_call.1} parent=1 // pred_fallthru
      _
    // Predicated region
    $region6: #{tpu_custom_call.1} parent=1 // pred_check
      _
    $region7: #{tpu_custom_call.1} parent=1 // pred_check_branch
      %27 = sbr.rel (0) target = $region9
    $region8: #{tpu_custom_call.1} parent=1 // pred_region
      %s29 = ssub.s32 128, 128
      %30 = vsyncadd [#allocation6], %s29
      %s32 = sshll.u32 [#allocation5], 4
      %s33 = int_to_ptr.vmem [resolvable:$true] %s32
      %35 = dma.hbm_to_vmem [thread:$0]  %s1, 128, %s33, [#allocation6]
    $region9: #{tpu_custom_call.1} parent=1 // pred_fallthru
      _
    // Predicated region
    $region10: #{tpu_custom_call.1} parent=1 // pred_check
      _
    $region11: #{tpu_custom_call.1} parent=1 // pred_check_branch
      %37 = sbr.rel (0) target = $region13
    $region12: #{tpu_custom_call.1} parent=1 // pred_region
      %s39 = ssub.s32 256, 256
      %40 = vsyncadd [#allocation6], %s39
      %s41 = sshll.u32 [#allocation7], 4
      %s42 = int_to_ptr.vmem [resolvable:$true] %s41
      %47 = dma.hbm_to_vmem [thread:$0]  %s2, 256, %s42, [#allocation6], 64, 64, 4
    $region13: #{tpu_custom_call.1} parent=1 // pred_fallthru
      _
    // Predicated region
    $region14: #{tpu_custom_call.1} parent=1 // pred_check
      _
    $region15: #{tpu_custom_call.1} parent=1 // pred_check_branch
      %49 = sbr.rel (0) target = $region17
    $region16: #{tpu_custom_call.1} parent=1 // pred_region
      %s51 = ssub.s32 16, 16
      %52 = vsyncadd [#allocation9], %s51
      %s54 = sshll.u32 [#allocation8], 4
      %s55 = int_to_ptr.vmem [resolvable:$true] %s54
      %57 = dma.hbm_to_vmem [thread:$0]  %s3, 16, %s55, [#allocation9]
    $region17: #{tpu_custom_call.1} parent=1 // pred_fallthru
      _
    // Predicated region
    $region18: #{tpu_custom_call.1} parent=1 // pred_check
      _
    $region19: #{tpu_custom_call.1} parent=1 // pred_check_branch
      %59 = sbr.rel (0) target = $region21
    $region20: #{tpu_custom_call.1} parent=1 // pred_region
      %s61 = ssub.s32 1024, 1024
      %62 = vsyncadd [#allocation9], %s61
      %s63 = sshll.u32 [#allocation10], 4
      %s64 = int_to_ptr.vmem [resolvable:$true] %s63
      %69 = dma.hbm_to_vmem [thread:$0]  %s4, 1024, %s64, [#allocation9], 64, 64, 4
    $region21: #{tpu_custom_call.1} parent=1 // pred_fallthru
      _
    // Predicated region
    $region22: #{tpu_custom_call.1} parent=1 // pred_check
      _
    $region23: #{tpu_custom_call.1} parent=1 // pred_check_branch
      %71 = sbr.rel (0) target = $region25
    $region24: #{tpu_custom_call.1} parent=1 // pred_region
      %s73 = ssub.s32 16, 16
      %74 = vsyncadd [#allocation12], %s73
      %s76 = sshll.u32 [#allocation11], 4
      %s77 = int_to_ptr.vmem [resolvable:$true] %s76
      %79 = dma.hbm_to_vmem [thread:$0]  %s5, 16, %s77, [#allocation12]
    $region25: #{tpu_custom_call.1} parent=1 // pred_fallthru
      _
    // Predicated region
    $region26: #{tpu_custom_call.1} parent=1 // pred_check
      _
    $region27: #{tpu_custom_call.1} parent=1 // pred_check_branch
      %81 = sbr.rel (0) target = $region29
    $region28: #{tpu_custom_call.1} parent=1 // pred_region
      %82 = dma.done [#allocation3], 64
    $region29: #{tpu_custom_call.1} parent=1 // pred_fallthru
      _
    // Predicated region
    $region30: #{tpu_custom_call.1} parent=1 // pred_check
      _
    $region31: #{tpu_custom_call.1} parent=1 // pred_check_branch
      %84 = sbr.rel (0) target = $region33
    $region32: #{tpu_custom_call.1} parent=1 // pred_region
      %85 = dma.done [#allocation6], 128
    $region33: #{tpu_custom_call.1} parent=1 // pred_fallthru
      _
    // Predicated region
    $region34: #{tpu_custom_call.1} parent=1 // pred_check
      _
    $region35: #{tpu_custom_call.1} parent=1 // pred_check_branch
      %87 = sbr.rel (0) target = $region37
    $region36: #{tpu_custom_call.1} parent=1 // pred_region
      %88 = dma.done [#allocation6], 256
    $region37: #{tpu_custom_call.1} parent=1 // pred_fallthru
      _
    // Predicated region
    $region38: #{tpu_custom_call.1} parent=1 // pred_check
      _
    $region39: #{tpu_custom_call.1} parent=1 // pred_check_branch
      %90 = sbr.rel (0) target = $region41
    $region40: #{tpu_custom_call.1} parent=1 // pred_region
      %91 = dma.done [#allocation9], 16
    $region41: #{tpu_custom_call.1} parent=1 // pred_fallthru
      _
    // Predicated region
    $region42: #{tpu_custom_call.1} parent=1 // pred_check
      _
    $region43: #{tpu_custom_call.1} parent=1 // pred_check_branch
      %93 = sbr.rel (0) target = $region45
    $region44: #{tpu_custom_call.1} parent=1 // pred_region
      %94 = dma.done [#allocation9], 1024
    $region45: #{tpu_custom_call.1} parent=1 // pred_fallthru
      _
    // Predicated region
    $region46: #{tpu_custom_call.1} parent=1 // pred_check
      _
    $region47: #{tpu_custom_call.1} parent=1 // pred_check_branch
      %96 = sbr.rel (0) target = $region49
    $region48: #{tpu_custom_call.1} parent=1 // pred_region
      %97 = dma.done [#allocation12], 16
    $region49: #{tpu_custom_call.1} parent=1 // pred_fallthru
      _
    %v99 = vld [vmem:[#allocation2] sm:$0xf]
    %v100 = vld [vmem:[#allocation7] sm:$0xf]
    %v101 = vld [vmem:[#allocation7 + $0x4] sm:$0xf]
    %v102 = vld [vmem:[#allocation7 + $0x8] sm:$0xf]
    %v103 = vld [vmem:[#allocation7 + $0xc] sm:$0xf]
    %v104 = vld [vmem:[#allocation8] sm:$0x1]
    %v106 = vlaneseq
    %v107 = vshrl.u32 %v106, 7
    %v108 = vsub.s32 0, %v107
    %v109 = vrot.slane %v104, %v108
    %v115 = vunpack.c.l.b16 %v100
    %v116 = vunpack.c.l.b16 %v101
    %v117 = vunpack.c.l.b16 %v102
    %v118 = vunpack.c.l.b16 %v103
    %v119 = vpack.c.b16 %v116, %v115
    %v120 = vpack.c.b16 %v118, %v117
    %vm123 = vcmask 261120
    %v125 = vsel %vm123, %v99, 0
    %127 = vmatprep.subr.bf16.mxu0 0
    %128 = vmatpush1.bf16.msra.mxu0 %v119
    %129 = vmatprep.subr.bf16.mxu0 0
    %130 = vmatpush1.bf16.msra.mxu0 %v120
    %131 = vmatprep.subr.bf16.mxu0 0
    %132 = vmatpush1.bf16.msra.mxu0 0
    %133 = vmatprep.subr.bf16.mxu0 0
    %134 = vmatpush1.bf16.msra.mxu0 0
    %135 = vmatprep.subr.bf16.mxu0 0
    %136 = vmatpush1.bf16.msra.mxu0 0
    %137 = vmatprep.subr.bf16.mxu0 0
    %138 = vmatpush1.bf16.msra.mxu0 0
    %139 = vmatprep.subr.bf16.mxu0 0
    %140 = vmatpush1.bf16.msra.mxu0 0
    %141 = vmatprep.subr.bf16.mxu0 0
    %142 = vmatpush1.bf16.msra.mxu0 0
    %143 = vmatprep.subr.bf16.mxu0 0
    %144 = vmatpush1.bf16.msra.mxu0 0
    %145 = vmatprep.subr.bf16.mxu0 0
    %146 = vmatpush1.bf16.msra.mxu0 0
    %147 = vmatprep.subr.bf16.mxu0 0
    %148 = vmatpush1.bf16.msra.mxu0 0
    %149 = vmatprep.subr.bf16.mxu0 0
    %150 = vmatpush1.bf16.msra.mxu0 0
    %151 = vmatprep.subr.bf16.mxu0 0
    %152 = vmatpush1.bf16.msra.mxu0 0
    %153 = vmatprep.subr.bf16.mxu0 0
    %154 = vmatpush1.bf16.msra.mxu0 0
    %155 = vmatprep.subr.bf16.mxu0 0
    %156 = vmatpush1.bf16.msra.mxu0 0
    %157 = vmatprep.subr.bf16.mxu0 0
    %158 = vmatpush1.bf16.msra.mxu0 0
    %159 = vmatprep.mubr.bf16.mxu0 0
    %160 = vmatmul.mubr.bf16.gmra.mrb[0].mxu0 %v125
    %v161 = vpop.f32.mrb[0].mxu0
    %v162 = vadd.f32 %v109, %v161
    %v163 = vpop.f32.mrb[0].mxu0
    %v164 = vpop.f32.mrb[0].mxu0
    %v165 = vpop.f32.mrb[0].mxu0
    %166 = vdwg.mxu0
    %v167 = vmax.f32 %v162, 0.0
    %v168 = vld [vmem:[#allocation5] sm:$0xff]
    %vm169 = vcmp.ge.s32.totalorder %v168, 0
    %v170 = vsel %vm169, %v167, 0.0
    %v171 = vpack.c.bf16 %v170, %v170
    %v172 = vld [vmem:[#allocation10] sm:$0xf]
    %v173 = vld [vmem:[#allocation10 + $0x4] sm:$0xf]
    %v174 = vld [vmem:[#allocation10 + $0x8] sm:$0xf]
    %v175 = vld [vmem:[#allocation10 + $0xc] sm:$0xf]
    %v176 = vld [vmem:[#allocation10 + $0x10] sm:$0xf]
    %v177 = vld [vmem:[#allocation10 + $0x14] sm:$0xf]
    %v178 = vld [vmem:[#allocation10 + $0x18] sm:$0xf]
    %v179 = vld [vmem:[#allocation10 + $0x1c] sm:$0xf]
    %v180 = vld [vmem:[#allocation10 + $0x20] sm:$0xf]
    %v181 = vld [vmem:[#allocation10 + $0x24] sm:$0xf]
    %v182 = vld [vmem:[#allocation10 + $0x28] sm:$0xf]
    %v183 = vld [vmem:[#allocation10 + $0x2c] sm:$0xf]
    %v184 = vld [vmem:[#allocation10 + $0x30] sm:$0xf]
    %v185 = vld [vmem:[#allocation10 + $0x34] sm:$0xf]
    %v186 = vld [vmem:[#allocation10 + $0x38] sm:$0xf]
    %v187 = vld [vmem:[#allocation10 + $0x3c] sm:$0xf]
    %v188 = vld [vmem:[#allocation11] sm:$0x1]
    %v190 = vlaneseq
    %v191 = vshrl.u32 %v190, 7
    %v192 = vsub.s32 0, %v191
    %v193 = vrot.slane %v188, %v192
    %v211 = vunpack.c.l.b16 %v172
    %v212 = vunpack.c.l.b16 %v173
    %v213 = vunpack.c.l.b16 %v174
    %v214 = vunpack.c.l.b16 %v175
    %v215 = vunpack.c.l.b16 %v176
    %v216 = vunpack.c.l.b16 %v177
    %v217 = vunpack.c.l.b16 %v178
    %v218 = vunpack.c.l.b16 %v179
    %v219 = vunpack.c.l.b16 %v180
    %v220 = vunpack.c.l.b16 %v181
    %v221 = vunpack.c.l.b16 %v182
    %v222 = vunpack.c.l.b16 %v183
    %v223 = vunpack.c.l.b16 %v184
    %v224 = vunpack.c.l.b16 %v185
    %v225 = vunpack.c.l.b16 %v186
    %v226 = vunpack.c.l.b16 %v187
    %v227 = vpack.c.b16 %v212, %v211
    %v228 = vpack.c.b16 %v214, %v213
    %v229 = vpack.c.b16 %v216, %v215
    %v230 = vpack.c.b16 %v218, %v217
    %v231 = vpack.c.b16 %v220, %v219
    %v232 = vpack.c.b16 %v222, %v221
    %v233 = vpack.c.b16 %v224, %v223
    %v234 = vpack.c.b16 %v226, %v225
    %243 = vmatprep.subr.bf16.mxu0 0
    %244 = vmatpush1.bf16.msra.mxu0 %v227
    %245 = vmatprep.subr.bf16.mxu0 0
    %246 = vmatpush1.bf16.msra.mxu0 %v228
    %247 = vmatprep.subr.bf16.mxu0 0
    %248 = vmatpush1.bf16.msra.mxu0 %v229
    %249 = vmatprep.subr.bf16.mxu0 0
    %250 = vmatpush1.bf16.msra.mxu0 %v230
    %251 = vmatprep.subr.bf16.mxu0 0
    %252 = vmatpush1.bf16.msra.mxu0 %v231
    %253 = vmatprep.subr.bf16.mxu0 0
    %254 = vmatpush1.bf16.msra.mxu0 %v232
    %255 = vmatprep.subr.bf16.mxu0 0
    %256 = vmatpush1.bf16.msra.mxu0 %v233
    %257 = vmatprep.subr.bf16.mxu0 0
    %258 = vmatpush1.bf16.msra.mxu0 %v234
    %259 = vmatprep.subr.bf16.mxu0 0
    %260 = vmatpush1.bf16.msra.mxu0 0
    %261 = vmatprep.subr.bf16.mxu0 0
    %262 = vmatpush1.bf16.msra.mxu0 0
    %263 = vmatprep.subr.bf16.mxu0 0
    %264 = vmatpush1.bf16.msra.mxu0 0
    %265 = vmatprep.subr.bf16.mxu0 0
    %266 = vmatpush1.bf16.msra.mxu0 0
    %267 = vmatprep.subr.bf16.mxu0 0
    %268 = vmatpush1.bf16.msra.mxu0 0
    %269 = vmatprep.subr.bf16.mxu0 0
    %270 = vmatpush1.bf16.msra.mxu0 0
    %271 = vmatprep.subr.bf16.mxu0 0
    %272 = vmatpush1.bf16.msra.mxu0 0
    %273 = vmatprep.subr.bf16.mxu0 0
    %274 = vmatpush1.bf16.msra.mxu0 0
    %275 = vmatprep.mubr.bf16.mxu0 0
    %276 = vmatmul.mubr.bf16.gmra.mrb[0].mxu0 %v171
    %v277 = vpop.f32.mrb[0].mxu0
    %v278 = vadd.f32 %v193, %v277
    %v279 = vpop.f32.mrb[0].mxu0
    %v280 = vpop.f32.mrb[0].mxu0
    %v281 = vpop.f32.mrb[0].mxu0
    %282 = vdwg.mxu0
    %283 = vst [vmem:[#allocation13] sm:$0xff] %v278
    // Predicated region
    $region50: #{tpu_custom_call.1} parent=1 // pred_check
      _
    $region51: #{tpu_custom_call.1} parent=1 // pred_check_branch
      %285 = sbr.rel (0) target = $region53
    $region52: #{tpu_custom_call.1} parent=1 // pred_region
      %s287 = ssub.s32 128, 128
      %288 = vsyncadd [#allocation4], %s287
      %s290 = sshll.u32 [#allocation13], 4
      %s291 = int_to_ptr.vmem [resolvable:$true] %s290
      %293 = dma.vmem_to_hbm [thread:$0]  %s291, 128, %s6, [#allocation4]
    $region53: #{tpu_custom_call.1} parent=1 // pred_fallthru
      _
    // Predicated region
    $region54: #{tpu_custom_call.1} parent=1 // pred_check
      _
    $region55: #{tpu_custom_call.1} parent=1 // pred_check_branch
      %295 = sbr.rel (0) target = $region57
    $region56: #{tpu_custom_call.1} parent=1 // pred_region
      %296 = dma.done [#allocation4], 128
    $region57: #{tpu_custom_call.1} parent=1 // pred_fallthru
      _
    %297 = vsyncpa [#allocation3], 1
    %298 = vsyncpa [#allocation6], 1
    %299 = vsyncpa [#allocation9], 1
    %300 = vsyncpa [#allocation12], 1
    %301 = vsyncpa [#allocation4], 1

</llo_original>
